<compile_context>
chip_gen: v5e
topology: v5e:2x2
jax: 0.10.0
libtpu: 0.0.40
codegen_flags: <defaults>
</compile_context>

<pallas_src>
import jax
import jax.numpy as jnp
from jax.experimental import pallas as pl
from jax.experimental.pallas import tpu as pltpu


def _round_up(n, m):
    return ((n + m - 1) // m) * m


def perceptron_kernel(x_ref, w_ref, b_ref, o_ref):
    # Hot path: z = sum(x * w, axis=-1) + b ; sigmoid(z).  No MXU, no transpose.
    x = x_ref[...]                                   # (TILE_B, D)  VMEM, pipelined
    w = w_ref[...]                                   # (1, D)       VMEM, resident
    b = b_ref[0]                                     # scalar       SMEM
    z = jnp.sum(x * w, axis=-1) + b                  # (TILE_B,)  VPU mul + XLU reduce
    # Lane-dense store: batch sits on the lane axis of a (1, TILE_B) slab.
    o_ref[...] = jax.nn.sigmoid(z).reshape(1, -1).astype(o_ref.dtype)


def _pick_tile_b(B, D):
    # ~4 MiB per x buffer (double-buffered by the pipeline) stays well inside
    # v7x's 64 MiB VMEM; cap at 1024 rows, floor at the 8-sublane granule.
    rows_by_vmem = max(8, (((4 * 1024 * 1024) // (4 * D)) // 8) * 8)
    return max(8, min(1024, rows_by_vmem, _round_up(B, 8)))


def perceptron_forward(x, weight, bias, tile_b=None):
    """x: (B, D) f32; weight: (1, D) f32; bias: (1,) f32 -> (B, 1) f32."""
    B, D = x.shape
    if tile_b is None:
        tile_b = _pick_tile_b(B, D)
    b_pad = _round_up(B, tile_b)
    if b_pad != B:
        x = jnp.pad(x, ((0, b_pad - B), (0, 0)))     # padded rows sliced off below
    grid = (b_pad // tile_b,)

    # TODO(synk): if input_dim were multi-thousand, also tile D as a trailing
    # "arbitrary" grid axis with an f32 VMEM accumulator (bias+sigmoid only in
    # the k==last finalize). Unnecessary here (input_dim=2).
    out_row = pl.pallas_call(
        perceptron_kernel,
        out_shape=jax.ShapeDtypeStruct((1, b_pad), jnp.float32),
        grid=grid,
        in_specs=[
            pl.BlockSpec((tile_b, D), lambda i: (i, 0)),           # x batch tile
            pl.BlockSpec((1, D), lambda i: (0, 0)),                # weight (resident)
            pl.BlockSpec(memory_space=pltpu.MemorySpace.SMEM),     # bias scalar
        ],
        out_specs=pl.BlockSpec((1, tile_b), lambda i: (0, i)),     # lane-dense output
        compiler_params=pltpu.CompilerParams(
            dimension_semantics=("parallel",),   # shard batch tiles across TCs (v7x)
            vmem_limit_bytes=32 * 1024 * 1024,
        ),
        cost_estimate=pl.CostEstimate(
            flops=2 * b_pad * D,
            transcendentals=b_pad,
            bytes_accessed=4 * (b_pad * D + D + 1 + b_pad),
        ),
    )(x, weight, bias)

    # Glue reshape outside the kernel: (1, B_pad) row -> (B, 1) column.
    return out_row[0, :B].reshape(B, 1)


def perceptron_reference(x, weight, bias):
    return jax.nn.sigmoid(x @ weight.T + bias[None, :])


if __name__ == "__main__":
    input_dim = 2
    batch = 8

    key = jax.random.PRNGKey(0)
    kx, kw, kb = jax.random.split(key, 3)

    # Deterministic parameter init (nn.Linear shapes: W (1, D), b (1,)).
    bound = 1.0 / (input_dim ** 0.5)
    weight = jax.random.uniform(kw, (1, input_dim), jnp.float32, -bound, bound)
    bias = jax.random.uniform(kb, (1,), jnp.float32, -bound, bound)
    x = jax.random.normal(kx, (batch, input_dim), jnp.float32)

    out = perceptron_forward(x, weight, bias)
    out = jax.block_until_ready(out)

    ref = perceptron_reference(x, weight, bias)
    assert out.shape == (batch, 1)
    assert jnp.allclose(out, ref, atol=1e-5, rtol=1e-5)

    print("KERNEL_OK")
</pallas_src>

<mosaic_0001>
module attributes {stable_mosaic.version = 11 : i64} {
  func.func @perceptron_kernel(%arg0: i32, %arg1: memref<8x2xf32, #tpu.memory_space<vmem>>, %arg2: memref<1x2xf32, #tpu.memory_space<vmem>>, %arg3: memref<1xf32, #tpu.memory_space<smem>>, %arg4: memref<1x8xf32, #tpu.memory_space<vmem>>) attributes {dimension_semantics = [#tpu.dimension_semantics<parallel>], iteration_bounds = array<i64: 1>, scalar_prefetch = 0 : i64, scratch_operands = 0 : i64, tpu.core_type = #tpu.core_type<tc>, window_params = [{transform_indices = @transform_0, window_bounds = array<i64: 8, 2>}, {pipeline_mode = #tpu.pipeline_mode<synchronous>, transform_indices = @transform_1, window_bounds = array<i64: 1, 2>}, {transform_indices = @transform_2, window_bounds = array<i64: 1>}, {transform_indices = @transform_3, window_bounds = array<i64: 1, 8>}]} {
    %c0 = arith.constant 0 : index
    %c0_0 = arith.constant 0 : index
    %0 = vector.load %arg1[%c0, %c0_0] : memref<8x2xf32, #tpu.memory_space<vmem>>, vector<8x2xf32>
    %c0_1 = arith.constant 0 : index
    %c0_2 = arith.constant 0 : index
    %1 = vector.load %arg2[%c0_1, %c0_2] : memref<1x2xf32, #tpu.memory_space<vmem>>, vector<1x2xf32>
    %c0_3 = arith.constant 0 : index
    %2 = memref.load %arg3[%c0_3] : memref<1xf32, #tpu.memory_space<smem>>
    %3 = vector.broadcast %1 : vector<1x2xf32> to vector<8x2xf32>
    %4 = arith.mulf %0, %3 : vector<8x2xf32>
    %cst = arith.constant dense<0.000000e+00> : vector<8xf32>
    %5 = vector.multi_reduction <add>, %4, %cst [1] : vector<8x2xf32> to vector<8xf32>
    %6 = vector.broadcast %2 : f32 to vector<8xf32>
    %7 = arith.addf %5, %6 : vector<8xf32>
    %8 = arith.negf %7 : vector<8xf32>
    %9 = math.exp %8 : vector<8xf32>
    %cst_4 = arith.constant 1.000000e+00 : f32
    %10 = vector.broadcast %cst_4 : f32 to vector<8xf32>
    %11 = arith.addf %10, %9 : vector<8xf32>
    %12 = arith.divf %10, %11 : vector<8xf32>
    %13 = vector.shape_cast %12 : vector<8xf32> to vector<1x8xf32>
    %c0_5 = arith.constant 0 : index
    %c0_6 = arith.constant 0 : index
    %14 = vector.load %arg4[%c0_5, %c0_6] : memref<1x8xf32, #tpu.memory_space<vmem>>, vector<1x8xf32>
    tpu.vector_store %arg4[%c0_5, %c0_6], %13 {strides = array<i32>} : memref<1x8xf32, #tpu.memory_space<vmem>>, vector<1x8xf32>,
    return
  }
  func.func @transform_0(%arg0: i32) -> (i32, i32) {
    %c0_i32 = arith.constant 0 : i32
    %c0_i32_0 = arith.constant 0 : i32
    return %arg0, %c0_i32 : i32, i32
  }
  func.func @transform_1(%arg0: i32) -> (i32, i32) {
    %c0_i32 = arith.constant 0 : i32
    %c0_i32_0 = arith.constant 0 : i32
    %c0_i32_1 = arith.constant 0 : i32
    return %c0_i32, %c0_i32_0 : i32, i32
  }
  func.func @transform_2(%arg0: i32) -> i32 {
    %c0_i32 = arith.constant 0 : i32
    %c0_i32_0 = arith.constant 0 : i32
    return %c0_i32 : i32
  }
  func.func @transform_3(%arg0: i32) -> (i32, i32) {
    %c0_i32 = arith.constant 0 : i32
    %c0_i32_0 = arith.constant 0 : i32
    return %c0_i32, %arg0 : i32, i32
  }
}

</mosaic_0001>

<llo_original>
// kernel: tpu_custom_call.1
$region0: #{tpu_custom_call.1}
  #allocation0 [shape = 'u32[]', space=smem, size = 0x4, offset = 0x4, fixed_abs, tag = 'smem constant byte address 0x4 - core index']
  #allocation1 [shape = 'u32[72,128]{1,0:T(1,128)}', space=vmem, size = 0x9000, scoped, tag = 'internal scratch']
  #allocation2 [shape = 'f32[1]{0:T(128)S(6)}', space=smem, size = 0x200, scoped, tag = 'scoped memory for tpu_custom_call.1']
  %s0 = inlined_call_operand.vmem [shape: f32[8,2], index: 0, kind: input, shape index: {}]
  %s1 = inlined_call_operand.vmem [shape: f32[1,2], index: 1, kind: input, shape index: {}]
  %s2 = inlined_call_operand.<no memory space> [shape: f32[1], index: 2, kind: input, shape index: {}]
  %s3 = inlined_call_operand.hbm [shape: f32[1,8], index: 3, kind: output, shape index: {}]
  %s4 = sld [smem:[#allocation0]]
  $region22: #{tpu_custom_call.1} parent=0
    _
  %s6 = ssub.s32 1, %s4
  %s7 = scalar_select 0, %s6, %s4
  %8 = sst [smem:[#allocation2]] %s2
  $region1: #{tpu_custom_call.1} parent=0
    #allocation3 [shape = 'u8[512]{0}', space=vmem, size = 0x400, scoped, tag = 'output window, operand 0, single buffered']
    #allocation4 [shape = 's32[1]{0}', space=sflag, size = 0x4, scoped, tag = 'scoped memory for tpu_custom_call.1']
    %9 = vsyncpa [#allocation4], 0
    // Predicated region
    $region2: #{tpu_custom_call.1} parent=1 // pred_check
      _
    $region3: #{tpu_custom_call.1} parent=1 // pred_check_branch
      %11 = sbr.rel (0) target = $region5
    $region4: #{tpu_custom_call.1} parent=1 // pred_region
      _
    $region5: #{tpu_custom_call.1} parent=1 // pred_fallthru
      _
    // Predicated region
    $region6: #{tpu_custom_call.1} parent=1 // pred_check
      _
    $region7: #{tpu_custom_call.1} parent=1 // pred_check_branch
      %13 = sbr.rel (0) target = $region9
    $region8: #{tpu_custom_call.1} parent=1 // pred_region
      _
    $region9: #{tpu_custom_call.1} parent=1 // pred_fallthru
      _
    // Predicated region
    $region10: #{tpu_custom_call.1} parent=1 // pred_check
      _
    $region11: #{tpu_custom_call.1} parent=1 // pred_check_branch
      %15 = sbr.rel (0) target = $region13
    $region12: #{tpu_custom_call.1} parent=1 // pred_region
      _
    $region13: #{tpu_custom_call.1} parent=1 // pred_fallthru
      _
    %v16 = vld [vmem:[%s0] sm:$0xff]
    %v17 = vld [vmem:[%s1] sm:$0x1]
    %s18 = sld [smem:[#allocation2]]
    %v20 = vperm.slane %v17, 0
    %v22 = vmul.f32 %v16, %v20
    %vm23 = vcmask 15360
    %v24 = vsel %vm23, %v22, 0.0
    %25 = vadd.xlane.f32.xlu0 %v24
    %v26 = vpop.xlane.xlu0 %25
    %v27 = vstv %s18
    %v28 = vadd.f32 %v26, %v27
    %v29 = vxor.u32 %v28, 2147483648
    %v30 = vmul.f32 %v29, 1.442695
    %v31 = vpow.pop %v30
    %v32 = vadd.f32 %v31, 1.0
    %v33 = vrcp.pop %v32
    %v34 = vmul.f32 %v32, %v33
    %v35 = vsub.f32 1.0, %v34
    %v36 = vmul.f32 %v33, %v35
    %v37 = vadd.f32 %v33, %v36
    %vm38 = vweird.f32 %v32
    %vm39 = vweird.f32 %v33
    %vm40 = vmor %vm38, %vm39
    %v41 = vsel %vm40, %v33, %v37
    %v42 = vand.u32 2147483647, %v32
    %vm43 = vcmp.eq.f32.partialorder %v42, 8.507059e+37
    %v44 = vand.u32 %v32, 2147483648
    %v45 = vor.u32 1.1754944e-38, %v44
    %v46 = vsel %vm43, %v45, %v41
    %v47 = vmul.f32 1.0, %v46
    %v49 = vlaneseq
    %v50 = vand.u32 %v49, 127
    %v51 = vperm.slane %v47, %v50
    %vm53 = vcmask 57344
    %54 = vst.msk [vmem:[#allocation3] sm:$0x1] %vm53, %v51
    // Predicated region
    $region14: #{tpu_custom_call.1} parent=1 // pred_check
      _
    $region15: #{tpu_custom_call.1} parent=1 // pred_check_branch
      %56 = sbr.rel (0) target = $region17
    $region16: #{tpu_custom_call.1} parent=1 // pred_region
      %58 = vsyncadd [#allocation4], 0
      %s60 = sshll.u32 [#allocation3], 4
      %s61 = int_to_ptr.vmem [resolvable:$true] %s60
      %s62 = sshll.u32 %s3, 4
      %s63 = int_to_ptr.hbm [resolvable:$true] %s62
      %65 = dma.vmem_to_hbm [thread:$0]  %s61, 16, %s63, [#allocation4]
    $region17: #{tpu_custom_call.1} parent=1 // pred_fallthru
      _
    // Predicated region
    $region18: #{tpu_custom_call.1} parent=1 // pred_check
      _
    $region19: #{tpu_custom_call.1} parent=1 // pred_check_branch
      %67 = sbr.rel (0) target = $region21
    $region20: #{tpu_custom_call.1} parent=1 // pred_region
      %69 = dma.done [#allocation4], 16
    $region21: #{tpu_custom_call.1} parent=1 // pred_fallthru
      _
    %70 = vsyncpa [#allocation4], 1

</llo_original>
